<compile_context>
chip_gen: v7x
topology: tpu7x:2x2x1
jax: 0.10.0
libtpu: 0.0.40
codegen_flags: <defaults>
</compile_context>

<pallas_src>
import functools

import jax
import jax.numpy as jnp
from jax.experimental import pallas as pl
from jax.experimental.pallas import tpu as pltpu

LANE_W = 1024      # lane-dense slab width (multiple of 128)
BLOCK_ROWS = 512   # rows per input block (multiple of 8) -> 2 MiB f32 blocks
STRIP_ROWS = 8     # in-block strip: one (8, LANE_W) slab per loop iteration
NPART_MAX = 2      # cap on the leading "core parallel" axis (v7x has 2 TCs)

GAMMA = 1.5
ALPHA = 0.25


def _num_tensorcores() -> int:
    """Best-effort TensorCores-per-device (v7x=2, v5e/v6e=1). Falls back to 1."""
    try:
        info = pltpu.get_tpu_info()
        for name in ("num_cores", "core_count", "num_tensorcores",
                     "tensorcores_per_chip", "num_cores_per_chip"):
            v = getattr(info, name, None)
            if isinstance(v, int) and v >= 1:
                return v
    except Exception:
        pass
    try:
        dev = jax.devices()[0]
        for name in ("num_cores", "core_count"):
            v = getattr(dev, name, None)
            if isinstance(v, int) and v >= 1:
                return v
    except Exception:
        pass
    return 1


def _qfocal_partial_kernel(pred_ref, true_ref, out_ref, *, block_rows, lane_w,
                           steps, num_blocks, tail_valid, gamma,
                           alpha_bias, alpha_slope):
    p = pl.program_id(0)
    i = pl.program_id(1)
    b = p * steps + i          # nominal block index (>= num_blocks for dups)

    @pl.when(i == 0)
    def _():
        out_ref[...] = jnp.zeros_like(out_ref)

    n_strips = block_rows // STRIP_ROWS
    unroll = 8 if n_strips % 8 == 0 else True

    def strip_loss(s):
        r0 = pl.multiple_of(s * STRIP_ROWS, STRIP_ROWS)
        x = pred_ref[pl.ds(r0, STRIP_ROWS), :].astype(jnp.float32)   # logits
        z = true_ref[pl.ds(r0, STRIP_ROWS), :].astype(jnp.float32)   # targets
        # Stable BCE-with-logits; exp(-|x|) is shared with the sigmoid.
        e = jnp.exp(-jnp.abs(x))
        bce = jnp.maximum(x, 0.0) - x * z + jnp.log1p(e)
        # sigmoid(x) = 1/(1+e) for x>=0, e/(1+e) for x<0 (numerically stable).
        # approx=True would shave EUP/VPU work on v7x; exact keeps f32 parity.
        r = pl.reciprocal(1.0 + e, approx=False)
        prob = jnp.where(x >= 0.0, r, e * r)
        af = alpha_bias + z * alpha_slope        # folded (1-a) + z*(2a-1)
        t = jnp.abs(z - prob)
        if gamma == 1.5:
            mod = t * jnp.sqrt(t)                # t**1.5 without pow
        elif gamma == 2.0:
            mod = t * t
        else:
            mod = t ** gamma
        return bce * af * mod                    # (STRIP_ROWS, lane_w)

    def fast_body(s, carry):
        out_ref[...] += strip_loss(s)
        return carry

    def masked_body(s, carry):
        l = strip_loss(s)
        # Block-local flat index (< block_rows*lane_w): no int32 overflow risk.
        row = jax.lax.broadcasted_iota(jnp.int32, l.shape, 0) + s * STRIP_ROWS
        lane = jax.lax.broadcasted_iota(jnp.int32, l.shape, 1)
        flat = row * lane_w + lane
        out_ref[...] += jnp.where(flat < tail_valid, l, 0.0)
        return carry

    last_is_full = tail_valid >= block_rows * lane_w   # Python bool (static)

    if last_is_full:
        @pl.when(b < num_blocks)
        def _():                                   # every real block is full
            jax.lax.fori_loop(0, n_strips, fast_body, 0, unroll=unroll)
    else:
        @pl.when(b < num_blocks - 1)
        def _():                                   # fully valid blocks
            jax.lax.fori_loop(0, n_strips, fast_body, 0, unroll=unroll)

        @pl.when(b == num_blocks - 1)
        def _():                                   # last block: mask ragged tail
            jax.lax.fori_loop(0, n_strips, masked_body, 0, unroll=unroll)
    # b >= num_blocks (clamped duplicate grid steps): skip compute entirely.


def qfocal_loss(pred, true, reduction="mean", gamma=GAMMA, alpha=ALPHA):
    """QFocalLoss(nn.BCEWithLogitsLoss(reduction='mean'), gamma=1.5, alpha=0.25)."""
    assert pred.shape == true.shape
    n = int(pred.size)
    assert n > 0
    if reduction not in ("mean", "sum"):
        # TODO(synk): reduction='none' (full elementwise loss map) not fused.
        raise NotImplementedError("only 'mean' / 'sum' reductions implemented")

    mult = 8 * LANE_W
    n_pad = -(-n // mult) * mult
    rows = n_pad // LANE_W                       # multiple of 8
    block_rows = min(BLOCK_ROWS, rows)           # multiple of 8
    num_blocks = -(-rows // block_rows)          # last block may be partial
    npart = max(1, min(_num_tensorcores(), NPART_MAX, num_blocks))
    steps = -(-num_blocks // npart)

    # Valid elements in the last (possibly ragged) block — compile-time int.
    tail_valid = n - (num_blocks - 1) * block_rows * LANE_W

    pred_f = pred.reshape(-1)
    true_f = true.reshape(-1)
    if n_pad != n:
        pred_f = jnp.pad(pred_f, (0, n_pad - n))
        true_f = jnp.pad(true_f, (0, n_pad - n))
    pred_f = pred_f.reshape(rows, LANE_W)
    true_f = true_f.reshape(rows, LANE_W)

    kernel = functools.partial(
        _qfocal_partial_kernel, block_rows=block_rows, lane_w=LANE_W,
        steps=steps, num_blocks=num_blocks, tail_valid=tail_valid,
        gamma=gamma, alpha_bias=float(1.0 - alpha),
        alpha_slope=float(2.0 * alpha - 1.0))

    def in_map(p, i):
        # Clamp so duplicate trailing steps (num_blocks % npart != 0) stay in
        # bounds; their compute is skipped inside the kernel.
        return (jnp.minimum(p * steps + i, num_blocks - 1), 0)

    # Only request a core-parallel leading axis when the chip really has >1 TC.
    if npart > 1 and hasattr(pltpu, "CORE_PARALLEL"):
        leading_sem = pltpu.CORE_PARALLEL
    else:
        leading_sem = "parallel"

    partials = pl.pallas_call(
        kernel,
        out_shape=jax.ShapeDtypeStruct((npart * 8, LANE_W), jnp.float32),
        grid_spec=pltpu.PrefetchScalarGridSpec(
            num_scalar_prefetch=0,
            grid=(npart, steps),
            in_specs=[
                pl.BlockSpec((block_rows, LANE_W), in_map),
                pl.BlockSpec((block_rows, LANE_W), in_map),
            ],
            out_specs=pl.BlockSpec((8, LANE_W), lambda p, i: (p, 0)),
        ),
        compiler_params=pltpu.CompilerParams(
            dimension_semantics=(leading_sem, "arbitrary")),
    )(pred_f, true_f)

    total = jnp.sum(partials, dtype=jnp.float32)
    if reduction == "mean":
        return total / jnp.float32(n)
    return total


def qfocal_loss_ref(pred, true, reduction="mean", gamma=GAMMA, alpha=ALPHA):
    """Pure-JAX reference matching the PyTorch module semantics."""
    x = pred.astype(jnp.float32)
    z = true.astype(jnp.float32)
    bce = jnp.maximum(x, 0.0) - x * z + jnp.log1p(jnp.exp(-jnp.abs(x)))
    p = jax.nn.sigmoid(x)
    loss = bce * (z * alpha + (1 - z) * (1 - alpha)) * (jnp.abs(z - p) ** gamma)
    return loss.mean() if reduction == "mean" else loss.sum()


if __name__ == "__main__":
    key = jax.random.PRNGKey(0)
    k1, k2 = jax.random.split(key)
    # pred: raw logits, true: soft targets in [0, 1] (quality focal loss).
    B, C, H, W = 2, 4, 16, 16
    pred = jax.random.normal(k1, (B, C, H, W), dtype=jnp.float32) * 2.0
    true = jax.random.uniform(k2, (B, C, H, W), dtype=jnp.float32)

    out = qfocal_loss(pred, true, reduction="mean")
    out = jax.block_until_ready(out)

    ref = qfocal_loss_ref(pred, true, reduction="mean")
    assert jnp.allclose(out, ref, rtol=1e-4, atol=1e-6), (out, ref)

    print("KERNEL_OK")
</pallas_src>

<mosaic_0001>
module attributes {stable_mosaic.version = 11 : i64} {
  func.func @_qfocal_partial_kernel(%arg0: i32, %arg1: i32, %arg2: memref<8x1024xf32, #tpu.memory_space<vmem>>, %arg3: memref<8x1024xf32, #tpu.memory_space<vmem>>, %arg4: memref<8x1024xf32, #tpu.memory_space<vmem>>) attributes {dimension_semantics = [#tpu.dimension_semantics<parallel>, #tpu.dimension_semantics<arbitrary>], iteration_bounds = array<i64: 1, 1>, scalar_prefetch = 0 : i64, scratch_operands = 0 : i64, tpu.core_type = #tpu.core_type<tc>, window_params = [{transform_indices = @transform_0, window_bounds = array<i64: 8, 1024>}, {transform_indices = @transform_1, window_bounds = array<i64: 8, 1024>}, {transform_indices = @transform_2, window_bounds = array<i64: 8, 1024>}]} {
    %c1_i32 = arith.constant 1 : i32
    %0 = arith.muli %arg0, %c1_i32 : i32
    %1 = arith.addi %0, %arg1 : i32
    %c0_i32 = arith.constant 0 : i32
    %2 = arith.cmpi eq, %arg1, %c0_i32 : i32
    %3 = arith.extui %2 : i1 to i32
    %c0_i32_0 = arith.constant 0 : i32
    %4 = arith.cmpi ne, %3, %c0_i32_0 : i32
    scf.if %4 {
      %cst = arith.constant 0.000000e+00 : f32
      %11 = vector.broadcast %cst : f32 to vector<8x1024xf32>
      %c0 = arith.constant 0 : index
      %c0_5 = arith.constant 0 : index
      %12 = vector.load %arg4[%c0, %c0_5] : memref<8x1024xf32, #tpu.memory_space<vmem>>, vector<8x1024xf32>
      tpu.vector_store %arg4[%c0, %c0_5], %11 {strides = array<i32>} : memref<8x1024xf32, #tpu.memory_space<vmem>>, vector<8x1024xf32>,
    } else {
    }
    %c0_i32_1 = arith.constant 0 : i32
    %5 = arith.cmpi slt, %1, %c0_i32_1 : i32
    %6 = arith.extui %5 : i1 to i32
    %c0_i32_2 = arith.constant 0 : i32
    %7 = arith.cmpi ne, %6, %c0_i32_2 : i32
    scf.if %7 {
      %c0_i32_5 = arith.constant 0 : i32
      %c0 = arith.constant 0 : index
      %c0_6 = arith.constant 0 : index
      %11 = vector.load %arg4[%c0, %c0_6] : memref<8x1024xf32, #tpu.memory_space<vmem>>, vector<8x1024xf32>
      %c8_i32 = arith.constant 8 : i32
      %12 = arith.muli %c0_i32_5, %c8_i32 : i32
      %13 = tpu.assume_multiple %12, 8 : i32
      %14 = arith.index_cast %13 : i32 to index
      %c0_7 = arith.constant 0 : index
      %15 = vector.load %arg2[%14, %c0_7] : memref<8x1024xf32, #tpu.memory_space<vmem>>, vector<8x1024xf32>
      %16 = arith.index_cast %13 : i32 to index
      %c0_8 = arith.constant 0 : index
      %17 = vector.load %arg3[%16, %c0_8] : memref<8x1024xf32, #tpu.memory_space<vmem>>, vector<8x1024xf32>
      %18 = math.absf %15 : vector<8x1024xf32>
      %cst = arith.constant 0.000000e+00 : f32
      %19 = vector.broadcast %cst : f32 to vector<8x1024xf32>
      %20 = arith.subf %19, %18 : vector<8x1024xf32>
      %21 = math.exp %20 : vector<8x1024xf32>
      %cst_9 = arith.constant 0.000000e+00 : f32
      %22 = vector.broadcast %cst_9 : f32 to vector<8x1024xf32>
      %23 = arith.maximumf %15, %22 : vector<8x1024xf32>
      %24 = arith.mulf %15, %17 : vector<8x1024xf32>
      %25 = arith.subf %23, %24 : vector<8x1024xf32>
      %26 = math.log1p %21 : vector<8x1024xf32>
      %27 = arith.addf %25, %26 : vector<8x1024xf32>
      %cst_10 = arith.constant 1.000000e+00 : f32
      %28 = vector.broadcast %cst_10 : f32 to vector<8x1024xf32>
      %29 = arith.addf %28, %21 : vector<8x1024xf32>
      %30 = tpu.reciprocal %29 : vector<8x1024xf32> -> vector<8x1024xf32>
      %cst_11 = arith.constant 0.000000e+00 : f32
      %31 = vector.broadcast %cst_11 : f32 to vector<8x1024xf32>
      %32 = arith.cmpf oge, %15, %31 : vector<8x1024xf32>
      %33 = arith.mulf %21, %30 : vector<8x1024xf32>
      %34 = arith.select %32, %30, %33 : vector<8x1024xi1>, vector<8x1024xf32>
      %cst_12 = arith.constant -5.000000e-01 : f32
      %35 = vector.broadcast %cst_12 : f32 to vector<8x1024xf32>
      %36 = arith.mulf %17, %35 : vector<8x1024xf32>
      %cst_13 = arith.constant 7.500000e-01 : f32
      %37 = vector.broadcast %cst_13 : f32 to vector<8x1024xf32>
      %38 = arith.addf %37, %36 : vector<8x1024xf32>
      %39 = arith.subf %17, %34 : vector<8x1024xf32>
      %40 = math.absf %39 : vector<8x1024xf32>
      %41 = math.sqrt %40 : vector<8x1024xf32>
      %42 = arith.mulf %40, %41 : vector<8x1024xf32>
      %43 = arith.mulf %27, %38 : vector<8x1024xf32>
      %44 = arith.mulf %43, %42 : vector<8x1024xf32>
      %45 = arith.addf %11, %44 : vector<8x1024xf32>
      %c0_14 = arith.constant 0 : index
      %c0_15 = arith.constant 0 : index
      %46 = vector.load %arg4[%c0_14, %c0_15] : memref<8x1024xf32, #tpu.memory_space<vmem>>, vector<8x1024xf32>
      tpu.vector_store %arg4[%c0_14, %c0_15], %45 {strides = array<i32>} : memref<8x1024xf32, #tpu.memory_space<vmem>>, vector<8x1024xf32>,
      %c1_i32_16 = arith.constant 1 : i32
    } else {
    }
    %c0_i32_3 = arith.constant 0 : i32
    %8 = arith.cmpi eq, %1, %c0_i32_3 : i32
    %9 = arith.extui %8 : i1 to i32
    %c0_i32_4 = arith.constant 0 : i32
    %10 = arith.cmpi ne, %9, %c0_i32_4 : i32
    scf.if %10 {
      %c0_i32_5 = arith.constant 0 : i32
      %c8_i32 = arith.constant 8 : i32
      %11 = arith.muli %c0_i32_5, %c8_i32 : i32
      %12 = tpu.assume_multiple %11, 8 : i32
      %13 = arith.index_cast %12 : i32 to index
      %c0 = arith.constant 0 : index
      %14 = vector.load %arg2[%13, %c0] : memref<8x1024xf32, #tpu.memory_space<vmem>>, vector<8x1024xf32>
      %15 = arith.index_cast %12 : i32 to index
      %c0_6 = arith.constant 0 : index
      %16 = vector.load %arg3[%15, %c0_6] : memref<8x1024xf32, #tpu.memory_space<vmem>>, vector<8x1024xf32>
      %17 = math.absf %14 : vector<8x1024xf32>
      %cst = arith.constant 0.000000e+00 : f32
      %18 = vector.broadcast %cst : f32 to vector<8x1024xf32>
      %19 = arith.subf %18, %17 : vector<8x1024xf32>
      %20 = math.exp %19 : vector<8x1024xf32>
      %cst_7 = arith.constant 0.000000e+00 : f32
      %21 = vector.broadcast %cst_7 : f32 to vector<8x1024xf32>
      %22 = arith.maximumf %14, %21 : vector<8x1024xf32>
      %23 = arith.mulf %14, %16 : vector<8x1024xf32>
      %24 = arith.subf %22, %23 : vector<8x1024xf32>
      %25 = math.log1p %20 : vector<8x1024xf32>
      %26 = arith.addf %24, %25 : vector<8x1024xf32>
      %cst_8 = arith.constant 1.000000e+00 : f32
      %27 = vector.broadcast %cst_8 : f32 to vector<8x1024xf32>
      %28 = arith.addf %27, %20 : vector<8x1024xf32>
      %29 = tpu.reciprocal %28 : vector<8x1024xf32> -> vector<8x1024xf32>
      %cst_9 = arith.constant 0.000000e+00 : f32
      %30 = vector.broadcast %cst_9 : f32 to vector<8x1024xf32>
      %31 = arith.cmpf oge, %14, %30 : vector<8x1024xf32>
      %32 = arith.mulf %20, %29 : vector<8x1024xf32>
      %33 = arith.select %31, %29, %32 : vector<8x1024xi1>, vector<8x1024xf32>
      %cst_10 = arith.constant -5.000000e-01 : f32
      %34 = vector.broadcast %cst_10 : f32 to vector<8x1024xf32>
      %35 = arith.mulf %16, %34 : vector<8x1024xf32>
      %cst_11 = arith.constant 7.500000e-01 : f32
      %36 = vector.broadcast %cst_11 : f32 to vector<8x1024xf32>
      %37 = arith.addf %36, %35 : vector<8x1024xf32>
      %38 = arith.subf %16, %33 : vector<8x1024xf32>
      %39 = math.absf %38 : vector<8x1024xf32>
      %40 = math.sqrt %39 : vector<8x1024xf32>
      %41 = arith.mulf %39, %40 : vector<8x1024xf32>
      %42 = arith.mulf %26, %37 : vector<8x1024xf32>
      %43 = arith.mulf %42, %41 : vector<8x1024xf32>
      %44 = tpu.iota {dimensions = array<i32: 0>} : vector<8x1024xi32>
      %c8_i32_12 = arith.constant 8 : i32
      %45 = arith.muli %c0_i32_5, %c8_i32_12 : i32
      %46 = vector.broadcast %45 : i32 to vector<8x1024xi32>
      %47 = arith.addi %44, %46 : vector<8x1024xi32>
      %48 = tpu.iota {dimensions = array<i32: 1>} : vector<8x1024xi32>
      %c1024_i32 = arith.constant 1024 : i32
      %49 = vector.broadcast %c1024_i32 : i32 to vector<8x1024xi32>
      %50 = arith.muli %47, %49 : vector<8x1024xi32>
      %51 = arith.addi %50, %48 : vector<8x1024xi32>
      %c0_13 = arith.constant 0 : index
      %c0_14 = arith.constant 0 : index
      %52 = vector.load %arg4[%c0_13, %c0_14] : memref<8x1024xf32, #tpu.memory_space<vmem>>, vector<8x1024xf32>
      %c2048_i32 = arith.constant 2048 : i32
      %53 = vector.broadcast %c2048_i32 : i32 to vector<8x1024xi32>
      %54 = arith.cmpi slt, %51, %53 : vector<8x1024xi32>
      %cst_15 = arith.constant 0.000000e+00 : f32
      %55 = vector.broadcast %cst_15 : f32 to vector<8x1024xf32>
      %56 = arith.select %54, %43, %55 : vector<8x1024xi1>, vector<8x1024xf32>
      %57 = arith.addf %52, %56 : vector<8x1024xf32>
      %c0_16 = arith.constant 0 : index
      %c0_17 = arith.constant 0 : index
      %58 = vector.load %arg4[%c0_16, %c0_17] : memref<8x1024xf32, #tpu.memory_space<vmem>>, vector<8x1024xf32>
      tpu.vector_store %arg4[%c0_16, %c0_17], %57 {strides = array<i32>} : memref<8x1024xf32, #tpu.memory_space<vmem>>, vector<8x1024xf32>,
      %c1_i32_18 = arith.constant 1 : i32
    } else {
    }
    return
  }
  func.func @transform_0(%arg0: i32, %arg1: i32) -> (i32, i32) {
    %c1_i32 = arith.constant 1 : i32
    %0 = arith.muli %arg0, %c1_i32 : i32
    %1 = arith.addi %0, %arg1 : i32
    %c0_i32 = arith.constant 0 : i32
    %2 = arith.minsi %1, %c0_i32 : i32
    %c0_i32_0 = arith.constant 0 : i32
    %c0_i32_1 = arith.constant 0 : i32
    return %2, %c0_i32_0 : i32, i32
  }
  func.func @transform_1(%arg0: i32, %arg1: i32) -> (i32, i32) {
    %c1_i32 = arith.constant 1 : i32
    %0 = arith.muli %arg0, %c1_i32 : i32
    %1 = arith.addi %0, %arg1 : i32
    %c0_i32 = arith.constant 0 : i32
    %2 = arith.minsi %1, %c0_i32 : i32
    %c0_i32_0 = arith.constant 0 : i32
    %c0_i32_1 = arith.constant 0 : i32
    return %2, %c0_i32_0 : i32, i32
  }
  func.func @transform_2(%arg0: i32, %arg1: i32) -> (i32, i32) {
    %c0_i32 = arith.constant 0 : i32
    %c0_i32_0 = arith.constant 0 : i32
    return %arg0, %c0_i32 : i32, i32
  }
}

</mosaic_0001>

<llo_original>
// kernel: tpu_custom_call.1
$region0: #{tpu_custom_call.1}
  #allocation0 [shape = 'u32[]', space=smem, size = 0x4, offset = 0x4, fixed_abs, tag = 'smem constant byte address 0x4 - core index']
  #allocation1 [shape = 'u32[144,128]{1,0:T(1,128)}', space=vmem, size = 0x12000, scoped, tag = 'internal scratch']
  %s0 = inlined_call_operand.hbm [shape: f32[8,1024], index: 0, kind: input, shape index: {}]
  %s1 = inlined_call_operand.hbm [shape: f32[8,1024], index: 1, kind: input, shape index: {}]
  %s2 = inlined_call_operand.hbm [shape: f32[8,1024], index: 2, kind: output, shape index: {}]
  %s3 = sld [smem:[#allocation0]]
  $region38: #{tpu_custom_call.1} parent=0
    _
  %s5 = ssub.s32 1, %s3
  %s6 = scalar_select 0, %s5, %s3
  $region1: #{tpu_custom_call.1} parent=0
    #allocation2 [shape = 'u8[32768]{0}', space=vmem, size = 0x8000, scoped, tag = 'input window, operand 0, single buffered']
    #allocation3 [shape = 's32[1]{0}', space=sflag, size = 0x4, scoped, tag = 'scoped memory for tpu_custom_call.1']
    #allocation4 [shape = 's32[1]{0}', space=sflag, size = 0x4, scoped, tag = 'scoped memory for tpu_custom_call.1']
    #allocation5 [shape = 'u8[32768]{0}', space=vmem, size = 0x8000, scoped, tag = 'input window, operand 1, single buffered']
    #allocation6 [shape = 's32[1]{0}', space=sflag, size = 0x4, scoped, tag = 'scoped memory for tpu_custom_call.1']
    #allocation7 [shape = 'u8[32768]{0}', space=vmem, size = 0x8000, scoped, tag = 'output window, operand 0, single buffered']
    %7 = vsyncpa [#allocation3], 0
    %8 = vsyncpa [#allocation6], 0
    %9 = vsyncpa [#allocation4], 0
    // Predicated region
    $region2: #{tpu_custom_call.1} parent=1 // pred_check
      _
    $region3: #{tpu_custom_call.1} parent=1 // pred_check_branch
      %11 = sbr.rel (0) target = $region5
    $region4: #{tpu_custom_call.1} parent=1 // pred_region
      %s12 = sadd.s32 0, 0
      %p13 = scmp.lt.s32.totalorder %s12, 0
      %s14 = scalar_select %p13, %s12, 0
      %s16 = ssub.s32 1024, 1024
      %17 = vsyncadd [#allocation3], %s16
      %s18 = smul.addr %s14, 8
      %s19 = smul.addr %s18, 128
      %s20 = scalar_lea.hbm %s0, %s19
      %s22 = sshll.u32 [#allocation2], 4
      %s23 = int_to_ptr.vmem [resolvable:$true] %s22
      %25 = dma.hbm_to_vmem [thread:$0]  %s20, 1024, %s23, [#allocation3]
    $region5: #{tpu_custom_call.1} parent=1 // pred_fallthru
      _
    // Predicated region
    $region6: #{tpu_custom_call.1} parent=1 // pred_check
      _
    $region7: #{tpu_custom_call.1} parent=1 // pred_check_branch
      %27 = sbr.rel (0) target = $region9
    $region8: #{tpu_custom_call.1} parent=1 // pred_region
      %s28 = sadd.s32 0, 0
      %p29 = scmp.lt.s32.totalorder %s28, 0
      %s30 = scalar_select %p29, %s28, 0
      %s32 = ssub.s32 1024, 1024
      %33 = vsyncadd [#allocation6], %s32
      %s34 = smul.addr %s30, 8
      %s35 = smul.addr %s34, 128
      %s36 = scalar_lea.hbm %s1, %s35
      %s38 = sshll.u32 [#allocation5], 4
      %s39 = int_to_ptr.vmem [resolvable:$true] %s38
      %41 = dma.hbm_to_vmem [thread:$0]  %s36, 1024, %s39, [#allocation6]
    $region9: #{tpu_custom_call.1} parent=1 // pred_fallthru
      _
    // Predicated region
    $region10: #{tpu_custom_call.1} parent=1 // pred_check
      _
    $region11: #{tpu_custom_call.1} parent=1 // pred_check_branch
      %43 = sbr.rel (0) target = $region13
    $region12: #{tpu_custom_call.1} parent=1 // pred_region
      %44 = dma.done [#allocation3], 1024
    $region13: #{tpu_custom_call.1} parent=1 // pred_fallthru
      _
    // Predicated region
    $region14: #{tpu_custom_call.1} parent=1 // pred_check
      _
    $region15: #{tpu_custom_call.1} parent=1 // pred_check_branch
      %46 = sbr.rel (0) target = $region17
    $region16: #{tpu_custom_call.1} parent=1 // pred_region
      %47 = dma.done [#allocation6], 1024
    $region17: #{tpu_custom_call.1} parent=1 // pred_fallthru
      _
    %s48 = sadd.s32 0, 0
    %p49 = scmp.lt.s32.totalorder %s48, 0
    %s50 = scalar_select %p49, %s48, 0
    %s51 = sadd.s32 0, 0
    %p52 = scmp.lt.s32.totalorder %s51, 0
    %s53 = scalar_select %p52, %s51, 0
    %s54 = sadd.s32 0, 0
    %p55 = scmp.eq.s32.totalorder 0, 0
    // Predicated region
    $region18: #{tpu_custom_call.1} parent=1 // pred_check
      %p56 = pneg %p55
    $region19: #{tpu_custom_call.1} parent=1 // pred_check_branch
      %58 = sbr.rel (%p56) target = $region21
    $region20: #{tpu_custom_call.1} parent=1 // pred_region
      %59 = vst [vmem:[#allocation7] sm:$0xff] 0.0
      %60 = vst [vmem:[#allocation7 + $0x8] sm:$0xff] 0.0
      %61 = vst [vmem:[#allocation7 + $0x10] sm:$0xff] 0.0
      %62 = vst [vmem:[#allocation7 + $0x18] sm:$0xff] 0.0
      %63 = vst [vmem:[#allocation7 + $0x20] sm:$0xff] 0.0
      %64 = vst [vmem:[#allocation7 + $0x28] sm:$0xff] 0.0
      %65 = vst [vmem:[#allocation7 + $0x30] sm:$0xff] 0.0
      %66 = vst [vmem:[#allocation7 + $0x38] sm:$0xff] 0.0
    $region21: #{tpu_custom_call.1} parent=1 // pred_fallthru
      _
    %p67 = scmp.lt.s32.totalorder %s54, 0
    // Predicated region
    $region22: #{tpu_custom_call.1} parent=1 // pred_check
      %p68 = pneg %p67
    $region23: #{tpu_custom_call.1} parent=1 // pred_check_branch
      %70 = sbr.rel (%p68) target = $region25
    $region24: #{tpu_custom_call.1} parent=1 // pred_region
      %v71 = vld [vmem:[#allocation7] sm:$0xff]
      %v72 = vld [vmem:[#allocation7 + $0x8] sm:$0xff]
      %v73 = vld [vmem:[#allocation7 + $0x10] sm:$0xff]
      %v74 = vld [vmem:[#allocation7 + $0x18] sm:$0xff]
      %v75 = vld [vmem:[#allocation7 + $0x20] sm:$0xff]
      %v76 = vld [vmem:[#allocation7 + $0x28] sm:$0xff]
      %v77 = vld [vmem:[#allocation7 + $0x30] sm:$0xff]
      %v78 = vld [vmem:[#allocation7 + $0x38] sm:$0xff]
      %s79 = smul.u32 0, 8
      %s80 = smul.addr %s79, 8
      %s81 = scalar_lea.vmem [#allocation2], %s80
      %v82 = vld [vmem:[%s81] sm:$0xff]
      %v83 = vld [vmem:[%s81 + $0x8] sm:$0xff]
      %v84 = vld [vmem:[%s81 + $0x10] sm:$0xff]
      %v85 = vld [vmem:[%s81 + $0x18] sm:$0xff]
      %v86 = vld [vmem:[%s81 + $0x20] sm:$0xff]
      %v87 = vld [vmem:[%s81 + $0x28] sm:$0xff]
      %v88 = vld [vmem:[%s81 + $0x30] sm:$0xff]
      %v89 = vld [vmem:[%s81 + $0x38] sm:$0xff]
      %s90 = smul.addr %s79, 8
      %s91 = scalar_lea.vmem [#allocation5], %s90
      %v92 = vld [vmem:[%s91] sm:$0xff]
      %v93 = vld [vmem:[%s91 + $0x8] sm:$0xff]
      %v94 = vld [vmem:[%s91 + $0x10] sm:$0xff]
      %v95 = vld [vmem:[%s91 + $0x18] sm:$0xff]
      %v96 = vld [vmem:[%s91 + $0x20] sm:$0xff]
      %v97 = vld [vmem:[%s91 + $0x28] sm:$0xff]
      %v98 = vld [vmem:[%s91 + $0x30] sm:$0xff]
      %v99 = vld [vmem:[%s91 + $0x38] sm:$0xff]
      %v100 = vand.u32 2147483647, %v82
      %v101 = vand.u32 2147483647, %v83
      %v102 = vand.u32 2147483647, %v84
      %v103 = vand.u32 2147483647, %v85
      %v104 = vand.u32 2147483647, %v86
      %v105 = vand.u32 2147483647, %v87
      %v106 = vand.u32 2147483647, %v88
      %v107 = vand.u32 2147483647, %v89
      %v108 = vsub.f32 0.0, %v100
      %v109 = vsub.f32 0.0, %v101
      %v110 = vsub.f32 0.0, %v102
      %v111 = vsub.f32 0.0, %v103
      %v112 = vsub.f32 0.0, %v104
      %v113 = vsub.f32 0.0, %v105
      %v114 = vsub.f32 0.0, %v106
      %v115 = vsub.f32 0.0, %v107
      %v116 = vmul.f32 %v108, 1.442695
      %v117 = vpow.pop %v116
      %v118 = vmul.f32 %v109, 1.442695
      %v119 = vpow.pop %v118
      %v120 = vmul.f32 %v110, 1.442695
      %v121 = vpow.pop %v120
      %v122 = vmul.f32 %v111, 1.442695
      %v123 = vpow.pop %v122
      %v124 = vmul.f32 %v112, 1.442695
      %v125 = vpow.pop %v124
      %v126 = vmul.f32 %v113, 1.442695
      %v127 = vpow.pop %v126
      %v128 = vmul.f32 %v114, 1.442695
      %v129 = vpow.pop %v128
      %v130 = vmul.f32 %v115, 1.442695
      %v131 = vpow.pop %v130
      %v132 = vmax.f32 %v82, 0.0
      %v133 = vmax.f32 %v83, 0.0
      %v134 = vmax.f32 %v84, 0.0
      %v135 = vmax.f32 %v85, 0.0
      %v136 = vmax.f32 %v86, 0.0
      %v137 = vmax.f32 %v87, 0.0
      %v138 = vmax.f32 %v88, 0.0
      %v139 = vmax.f32 %v89, 0.0
      %v140 = vmul.f32 %v82, %v92
      %v141 = vmul.f32 %v83, %v93
      %v142 = vmul.f32 %v84, %v94
      %v143 = vmul.f32 %v85, %v95
      %v144 = vmul.f32 %v86, %v96
      %v145 = vmul.f32 %v87, %v97
      %v146 = vmul.f32 %v88, %v98
      %v147 = vmul.f32 %v89, %v99
      %v148 = vsub.f32 %v132, %v140
      %v149 = vsub.f32 %v133, %v141
      %v150 = vsub.f32 %v134, %v142
      %v151 = vsub.f32 %v135, %v143
      %v152 = vsub.f32 %v136, %v144
      %v153 = vsub.f32 %v137, %v145
      %v154 = vsub.f32 %v138, %v146
      %v155 = vsub.f32 %v139, %v147
      %v156 = vadd.f32 %v117, 1.0
      %v157 = vlog2.pop %v156
      %v158 = vmul.f32 %v157, 0.6931472
      %v159 = vmul.f32 -0.5, %v117
      %v160 = vadd.f32 %v159, 1.0
      %v161 = vmul.f32 %v160, %v117
      %v162 = vand.u32 2147483647, %v117
      %vm163 = vcmp.lt.f32.partialorder %v162, 0.0004427343
      %v164 = vsel %vm163, %v161, %v158
      %v165 = vadd.f32 %v119, 1.0
      %v166 = vlog2.pop %v165
      %v167 = vmul.f32 %v166, 0.6931472
      %v168 = vmul.f32 -0.5, %v119
      %v169 = vadd.f32 %v168, 1.0
      %v170 = vmul.f32 %v169, %v119
      %v171 = vand.u32 2147483647, %v119
      %vm172 = vcmp.lt.f32.partialorder %v171, 0.0004427343
      %v173 = vsel %vm172, %v170, %v167
      %v174 = vadd.f32 %v121, 1.0
      %v175 = vlog2.pop %v174
      %v176 = vmul.f32 %v175, 0.6931472
      %v177 = vmul.f32 -0.5, %v121
      %v178 = vadd.f32 %v177, 1.0
      %v179 = vmul.f32 %v178, %v121
      %v180 = vand.u32 2147483647, %v121
      %vm181 = vcmp.lt.f32.partialorder %v180, 0.0004427343
      %v182 = vsel %vm181, %v179, %v176
      %v183 = vadd.f32 %v123, 1.0
      %v184 = vlog2.pop %v183
      %v185 = vmul.f32 %v184, 0.6931472
      %v186 = vmul.f32 -0.5, %v123
      %v187 = vadd.f32 %v186, 1.0
      %v188 = vmul.f32 %v187, %v123
      %v189 = vand.u32 2147483647, %v123
      %vm190 = vcmp.lt.f32.partialorder %v189, 0.0004427343
      %v191 = vsel %vm190, %v188, %v185
      %v192 = vadd.f32 %v125, 1.0
      %v193 = vlog2.pop %v192
      %v194 = vmul.f32 %v193, 0.6931472
      %v195 = vmul.f32 -0.5, %v125
      %v196 = vadd.f32 %v195, 1.0
      %v197 = vmul.f32 %v196, %v125
      %v198 = vand.u32 2147483647, %v125
      %vm199 = vcmp.lt.f32.partialorder %v198, 0.0004427343
      %v200 = vsel %vm199, %v197, %v194
      %v201 = vadd.f32 %v127, 1.0
      %v202 = vlog2.pop %v201
      %v203 = vmul.f32 %v202, 0.6931472
      %v204 = vmul.f32 -0.5, %v127
      %v205 = vadd.f32 %v204, 1.0
      %v206 = vmul.f32 %v205, %v127
      %v207 = vand.u32 2147483647, %v127
      %vm208 = vcmp.lt.f32.partialorder %v207, 0.0004427343
      %v209 = vsel %vm208, %v206, %v203
      %v210 = vadd.f32 %v129, 1.0
      %v211 = vlog2.pop %v210
      %v212 = vmul.f32 %v211, 0.6931472
      %v213 = vmul.f32 -0.5, %v129
      %v214 = vadd.f32 %v213, 1.0
      %v215 = vmul.f32 %v214, %v129
      %v216 = vand.u32 2147483647, %v129
      %vm217 = vcmp.lt.f32.partialorder %v216, 0.0004427343
      %v218 = vsel %vm217, %v215, %v212
      %v219 = vadd.f32 %v131, 1.0
      %v220 = vlog2.pop %v219
      %v221 = vmul.f32 %v220, 0.6931472
      %v222 = vmul.f32 -0.5, %v131
      %v223 = vadd.f32 %v222, 1.0
      %v224 = vmul.f32 %v223, %v131
      %v225 = vand.u32 2147483647, %v131
      %vm226 = vcmp.lt.f32.partialorder %v225, 0.0004427343
      %v227 = vsel %vm226, %v224, %v221
      %v228 = vadd.f32 %v148, %v164
      %v229 = vadd.f32 %v149, %v173
      %v230 = vadd.f32 %v150, %v182
      %v231 = vadd.f32 %v151, %v191
      %v232 = vadd.f32 %v152, %v200
      %v233 = vadd.f32 %v153, %v209
      %v234 = vadd.f32 %v154, %v218
      %v235 = vadd.f32 %v155, %v227
      %v236 = vadd.f32 %v117, 1.0
      %v237 = vadd.f32 %v119, 1.0
      %v238 = vadd.f32 %v121, 1.0
      %v239 = vadd.f32 %v123, 1.0
      %v240 = vadd.f32 %v125, 1.0
      %v241 = vadd.f32 %v127, 1.0
      %v242 = vadd.f32 %v129, 1.0
      %v243 = vadd.f32 %v131, 1.0
      %v244 = vrcp.pop %v236
      %v245 = vrcp.pop %v237
      %v246 = vrcp.pop %v238
      %v247 = vrcp.pop %v239
      %v248 = vrcp.pop %v240
      %v249 = vrcp.pop %v241
      %v250 = vrcp.pop %v242
      %v251 = vrcp.pop %v243
      %vm252 = vcmp.ge.f32.partialorder %v82, 0.0
      %vm253 = vcmp.ge.f32.partialorder %v83, 0.0
      %vm254 = vcmp.ge.f32.partialorder %v84, 0.0
      %vm255 = vcmp.ge.f32.partialorder %v85, 0.0
      %vm256 = vcmp.ge.f32.partialorder %v86, 0.0
      %vm257 = vcmp.ge.f32.partialorder %v87, 0.0
      %vm258 = vcmp.ge.f32.partialorder %v88, 0.0
      %vm259 = vcmp.ge.f32.partialorder %v89, 0.0
      %v260 = vmul.f32 %v117, %v244
      %v261 = vmul.f32 %v119, %v245
      %v262 = vmul.f32 %v121, %v246
      %v263 = vmul.f32 %v123, %v247
      %v264 = vmul.f32 %v125, %v248
      %v265 = vmul.f32 %v127, %v249
      %v266 = vmul.f32 %v129, %v250
      %v267 = vmul.f32 %v131, %v251
      %v268 = vsel %vm252, %v244, %v260
      %v269 = vsel %vm253, %v245, %v261
      %v270 = vsel %vm254, %v246, %v262
      %v271 = vsel %vm255, %v247, %v263
      %v272 = vsel %vm256, %v248, %v264
      %v273 = vsel %vm257, %v249, %v265
      %v274 = vsel %vm258, %v250, %v266
      %v275 = vsel %vm259, %v251, %v267
      %v276 = vmul.f32 %v92, -0.5
      %v277 = vmul.f32 %v93, -0.5
      %v278 = vmul.f32 %v94, -0.5
      %v279 = vmul.f32 %v95, -0.5
      %v280 = vmul.f32 %v96, -0.5
      %v281 = vmul.f32 %v97, -0.5
      %v282 = vmul.f32 %v98, -0.5
      %v283 = vmul.f32 %v99, -0.5
      %v284 = vadd.f32 %v276, 0.75
      %v285 = vadd.f32 %v277, 0.75
      %v286 = vadd.f32 %v278, 0.75
      %v287 = vadd.f32 %v279, 0.75
      %v288 = vadd.f32 %v280, 0.75
      %v289 = vadd.f32 %v281, 0.75
      %v290 = vadd.f32 %v282, 0.75
      %v291 = vadd.f32 %v283, 0.75
      %v292 = vsub.f32 %v92, %v268
      %v293 = vsub.f32 %v93, %v269
      %v294 = vsub.f32 %v94, %v270
      %v295 = vsub.f32 %v95, %v271
      %v296 = vsub.f32 %v96, %v272
      %v297 = vsub.f32 %v97, %v273
      %v298 = vsub.f32 %v98, %v274
      %v299 = vsub.f32 %v99, %v275
      %v300 = vand.u32 2147483647, %v292
      %v301 = vand.u32 2147483647, %v293
      %v302 = vand.u32 2147483647, %v294
      %v303 = vand.u32 2147483647, %v295
      %v304 = vand.u32 2147483647, %v296
      %v305 = vand.u32 2147483647, %v297
      %v306 = vand.u32 2147483647, %v298
      %v307 = vand.u32 2147483647, %v299
      %v308 = vrsqrt.pop %v300
      %v309 = vmul.f32 %v300, %v308
      %vm310 = vcmp.eq.f32.partialorder %v300, inf
      %v311 = vsel %vm310, %v300, %v309
      %vm312 = vcmp.eq.f32.partialorder %v300, 0.0
      %v313 = vand.u32 %v300, 2147483648
      %v314 = vsel %vm312, %v313, %v311
      %v315 = vrsqrt.pop %v301
      %v316 = vmul.f32 %v301, %v315
      %vm317 = vcmp.eq.f32.partialorder %v301, inf
      %v318 = vsel %vm317, %v301, %v316
      %vm319 = vcmp.eq.f32.partialorder %v301, 0.0
      %v320 = vand.u32 %v301, 2147483648
      %v321 = vsel %vm319, %v320, %v318
      %v322 = vrsqrt.pop %v302
      %v323 = vmul.f32 %v302, %v322
      %vm324 = vcmp.eq.f32.partialorder %v302, inf
      %v325 = vsel %vm324, %v302, %v323
      %vm326 = vcmp.eq.f32.partialorder %v302, 0.0
      %v327 = vand.u32 %v302, 2147483648
      %v328 = vsel %vm326, %v327, %v325
      %v329 = vrsqrt.pop %v303
      %v330 = vmul.f32 %v303, %v329
      %vm331 = vcmp.eq.f32.partialorder %v303, inf
      %v332 = vsel %vm331, %v303, %v330
      %vm333 = vcmp.eq.f32.partialorder %v303, 0.0
      %v334 = vand.u32 %v303, 2147483648
      %v335 = vsel %vm333, %v334, %v332
      %v336 = vrsqrt.pop %v304
      %v337 = vmul.f32 %v304, %v336
      %vm338 = vcmp.eq.f32.partialorder %v304, inf
      %v339 = vsel %vm338, %v304, %v337
      %vm340 = vcmp.eq.f32.partialorder %v304, 0.0
      %v341 = vand.u32 %v304, 2147483648
      %v342 = vsel %vm340, %v341, %v339
      %v343 = vrsqrt.pop %v305
      %v344 = vmul.f32 %v305, %v343
      %vm345 = vcmp.eq.f32.partialorder %v305, inf
      %v346 = vsel %vm345, %v305, %v344
      %vm347 = vcmp.eq.f32.partialorder %v305, 0.0
      %v348 = vand.u32 %v305, 2147483648
      %v349 = vsel %vm347, %v348, %v346
      %v350 = vrsqrt.pop %v306
      %v351 = vmul.f32 %v306, %v350
      %vm352 = vcmp.eq.f32.partialorder %v306, inf
      %v353 = vsel %vm352, %v306, %v351
      %vm354 = vcmp.eq.f32.partialorder %v306, 0.0
      %v355 = vand.u32 %v306, 2147483648
      %v356 = vsel %vm354, %v355, %v353
      %v357 = vrsqrt.pop %v307
      %v358 = vmul.f32 %v307, %v357
      %vm359 = vcmp.eq.f32.partialorder %v307, inf
      %v360 = vsel %vm359, %v307, %v358
      %vm361 = vcmp.eq.f32.partialorder %v307, 0.0
      %v362 = vand.u32 %v307, 2147483648
      %v363 = vsel %vm361, %v362, %v360
      %v364 = vmul.f32 %v300, %v314
      %v365 = vmul.f32 %v301, %v321
      %v366 = vmul.f32 %v302, %v328
      %v367 = vmul.f32 %v303, %v335
      %v368 = vmul.f32 %v304, %v342
      %v369 = vmul.f32 %v305, %v349
      %v370 = vmul.f32 %v306, %v356
      %v371 = vmul.f32 %v307, %v363
      %v372 = vmul.f32 %v228, %v284
      %v373 = vmul.f32 %v229, %v285
      %v374 = vmul.f32 %v230, %v286
      %v375 = vmul.f32 %v231, %v287
      %v376 = vmul.f32 %v232, %v288
      %v377 = vmul.f32 %v233, %v289
      %v378 = vmul.f32 %v234, %v290
      %v379 = vmul.f32 %v235, %v291
      %v380 = vmul.f32 %v372, %v364
      %v381 = vmul.f32 %v373, %v365
      %v382 = vmul.f32 %v374, %v366
      %v383 = vmul.f32 %v375, %v367
      %v384 = vmul.f32 %v376, %v368
      %v385 = vmul.f32 %v377, %v369
      %v386 = vmul.f32 %v378, %v370
      %v387 = vmul.f32 %v379, %v371
      %v388 = vadd.f32 %v71, %v380
      %v389 = vadd.f32 %v72, %v381
      %v390 = vadd.f32 %v73, %v382
      %v391 = vadd.f32 %v74, %v383
      %v392 = vadd.f32 %v75, %v384
      %v393 = vadd.f32 %v76, %v385
      %v394 = vadd.f32 %v77, %v386
      %v395 = vadd.f32 %v78, %v387
      %396 = vst [vmem:[#allocation7] sm:$0xff] %v388
      %397 = vst [vmem:[#allocation7 + $0x8] sm:$0xff] %v389
      %398 = vst [vmem:[#allocation7 + $0x10] sm:$0xff] %v390
      %399 = vst [vmem:[#allocation7 + $0x18] sm:$0xff] %v391
      %400 = vst [vmem:[#allocation7 + $0x20] sm:$0xff] %v392
      %401 = vst [vmem:[#allocation7 + $0x28] sm:$0xff] %v393
      %402 = vst [vmem:[#allocation7 + $0x30] sm:$0xff] %v394
      %403 = vst [vmem:[#allocation7 + $0x38] sm:$0xff] %v395
    $region25: #{tpu_custom_call.1} parent=1 // pred_fallthru
      _
    %p404 = scmp.eq.s32.totalorder %s54, 0
    // Predicated region
    $region26: #{tpu_custom_call.1} parent=1 // pred_check
      %p405 = pneg %p404
    $region27: #{tpu_custom_call.1} parent=1 // pred_check_branch
      %407 = sbr.rel (%p405) target = $region29
    $region28: #{tpu_custom_call.1} parent=1 // pred_region
      %s408 = smul.u32 0, 8
      %s409 = smul.addr %s408, 8
      %s410 = scalar_lea.vmem [#allocation2], %s409
      %v411 = vld [vmem:[%s410] sm:$0xff]
      %v412 = vld [vmem:[%s410 + $0x8] sm:$0xff]
      %v413 = vld [vmem:[%s410 + $0x10] sm:$0xff]
      %v414 = vld [vmem:[%s410 + $0x18] sm:$0xff]
      %v415 = vld [vmem:[%s410 + $0x20] sm:$0xff]
      %v416 = vld [vmem:[%s410 + $0x28] sm:$0xff]
      %v417 = vld [vmem:[%s410 + $0x30] sm:$0xff]
      %v418 = vld [vmem:[%s410 + $0x38] sm:$0xff]
      %s419 = smul.addr %s408, 8
      %s420 = scalar_lea.vmem [#allocation5], %s419
      %v421 = vld [vmem:[%s420] sm:$0xff]
      %v422 = vld [vmem:[%s420 + $0x8] sm:$0xff]
      %v423 = vld [vmem:[%s420 + $0x10] sm:$0xff]
      %v424 = vld [vmem:[%s420 + $0x18] sm:$0xff]
      %v425 = vld [vmem:[%s420 + $0x20] sm:$0xff]
      %v426 = vld [vmem:[%s420 + $0x28] sm:$0xff]
      %v427 = vld [vmem:[%s420 + $0x30] sm:$0xff]
      %v428 = vld [vmem:[%s420 + $0x38] sm:$0xff]
      %v429 = vand.u32 2147483647, %v411
      %v430 = vand.u32 2147483647, %v412
      %v431 = vand.u32 2147483647, %v413
      %v432 = vand.u32 2147483647, %v414
      %v433 = vand.u32 2147483647, %v415
      %v434 = vand.u32 2147483647, %v416
      %v435 = vand.u32 2147483647, %v417
      %v436 = vand.u32 2147483647, %v418
      %v437 = vsub.f32 0.0, %v429
      %v438 = vsub.f32 0.0, %v430
      %v439 = vsub.f32 0.0, %v431
      %v440 = vsub.f32 0.0, %v432
      %v441 = vsub.f32 0.0, %v433
      %v442 = vsub.f32 0.0, %v434
      %v443 = vsub.f32 0.0, %v435
      %v444 = vsub.f32 0.0, %v436
      %v445 = vmul.f32 %v437, 1.442695
      %v446 = vpow.pop %v445
      %v447 = vmul.f32 %v438, 1.442695
      %v448 = vpow.pop %v447
      %v449 = vmul.f32 %v439, 1.442695
      %v450 = vpow.pop %v449
      %v451 = vmul.f32 %v440, 1.442695
      %v452 = vpow.pop %v451
      %v453 = vmul.f32 %v441, 1.442695
      %v454 = vpow.pop %v453
      %v455 = vmul.f32 %v442, 1.442695
      %v456 = vpow.pop %v455
      %v457 = vmul.f32 %v443, 1.442695
      %v458 = vpow.pop %v457
      %v459 = vmul.f32 %v444, 1.442695
      %v460 = vpow.pop %v459
      %v461 = vmax.f32 %v411, 0.0
      %v462 = vmax.f32 %v412, 0.0
      %v463 = vmax.f32 %v413, 0.0
      %v464 = vmax.f32 %v414, 0.0
      %v465 = vmax.f32 %v415, 0.0
      %v466 = vmax.f32 %v416, 0.0
      %v467 = vmax.f32 %v417, 0.0
      %v468 = vmax.f32 %v418, 0.0
      %v469 = vmul.f32 %v411, %v421
      %v470 = vmul.f32 %v412, %v422
      %v471 = vmul.f32 %v413, %v423
      %v472 = vmul.f32 %v414, %v424
      %v473 = vmul.f32 %v415, %v425
      %v474 = vmul.f32 %v416, %v426
      %v475 = vmul.f32 %v417, %v427
      %v476 = vmul.f32 %v418, %v428
      %v477 = vsub.f32 %v461, %v469
      %v478 = vsub.f32 %v462, %v470
      %v479 = vsub.f32 %v463, %v471
      %v480 = vsub.f32 %v464, %v472
      %v481 = vsub.f32 %v465, %v473
      %v482 = vsub.f32 %v466, %v474
      %v483 = vsub.f32 %v467, %v475
      %v484 = vsub.f32 %v468, %v476
      %v485 = vadd.f32 %v446, 1.0
      %v486 = vlog2.pop %v485
      %v487 = vmul.f32 %v486, 0.6931472
      %v488 = vmul.f32 -0.5, %v446
      %v489 = vadd.f32 %v488, 1.0
      %v490 = vmul.f32 %v489, %v446
      %v491 = vand.u32 2147483647, %v446
      %vm492 = vcmp.lt.f32.partialorder %v491, 0.0004427343
      %v493 = vsel %vm492, %v490, %v487
      %v494 = vadd.f32 %v448, 1.0
      %v495 = vlog2.pop %v494
      %v496 = vmul.f32 %v495, 0.6931472
      %v497 = vmul.f32 -0.5, %v448
      %v498 = vadd.f32 %v497, 1.0
      %v499 = vmul.f32 %v498, %v448
      %v500 = vand.u32 2147483647, %v448
      %vm501 = vcmp.lt.f32.partialorder %v500, 0.0004427343
      %v502 = vsel %vm501, %v499, %v496
      %v503 = vadd.f32 %v450, 1.0
      %v504 = vlog2.pop %v503
      %v505 = vmul.f32 %v504, 0.6931472
      %v506 = vmul.f32 -0.5, %v450
      %v507 = vadd.f32 %v506, 1.0
      %v508 = vmul.f32 %v507, %v450
      %v509 = vand.u32 2147483647, %v450
      %vm510 = vcmp.lt.f32.partialorder %v509, 0.0004427343
      %v511 = vsel %vm510, %v508, %v505
      %v512 = vadd.f32 %v452, 1.0
      %v513 = vlog2.pop %v512
      %v514 = vmul.f32 %v513, 0.6931472
      %v515 = vmul.f32 -0.5, %v452
      %v516 = vadd.f32 %v515, 1.0
      %v517 = vmul.f32 %v516, %v452
      %v518 = vand.u32 2147483647, %v452
      %vm519 = vcmp.lt.f32.partialorder %v518, 0.0004427343
      %v520 = vsel %vm519, %v517, %v514
      %v521 = vadd.f32 %v454, 1.0
      %v522 = vlog2.pop %v521
      %v523 = vmul.f32 %v522, 0.6931472
      %v524 = vmul.f32 -0.5, %v454
      %v525 = vadd.f32 %v524, 1.0
      %v526 = vmul.f32 %v525, %v454
      %v527 = vand.u32 2147483647, %v454
      %vm528 = vcmp.lt.f32.partialorder %v527, 0.0004427343
      %v529 = vsel %vm528, %v526, %v523
      %v530 = vadd.f32 %v456, 1.0
      %v531 = vlog2.pop %v530
      %v532 = vmul.f32 %v531, 0.6931472
      %v533 = vmul.f32 -0.5, %v456
      %v534 = vadd.f32 %v533, 1.0
      %v535 = vmul.f32 %v534, %v456
      %v536 = vand.u32 2147483647, %v456
      %vm537 = vcmp.lt.f32.partialorder %v536, 0.0004427343
      %v538 = vsel %vm537, %v535, %v532
      %v539 = vadd.f32 %v458, 1.0
      %v540 = vlog2.pop %v539
      %v541 = vmul.f32 %v540, 0.6931472
      %v542 = vmul.f32 -0.5, %v458
      %v543 = vadd.f32 %v542, 1.0
      %v544 = vmul.f32 %v543, %v458
      %v545 = vand.u32 2147483647, %v458
      %vm546 = vcmp.lt.f32.partialorder %v545, 0.0004427343
      %v547 = vsel %vm546, %v544, %v541
      %v548 = vadd.f32 %v460, 1.0
      %v549 = vlog2.pop %v548
      %v550 = vmul.f32 %v549, 0.6931472
      %v551 = vmul.f32 -0.5, %v460
      %v552 = vadd.f32 %v551, 1.0
      %v553 = vmul.f32 %v552, %v460
      %v554 = vand.u32 2147483647, %v460
      %vm555 = vcmp.lt.f32.partialorder %v554, 0.0004427343
      %v556 = vsel %vm555, %v553, %v550
      %v557 = vadd.f32 %v477, %v493
      %v558 = vadd.f32 %v478, %v502
      %v559 = vadd.f32 %v479, %v511
      %v560 = vadd.f32 %v480, %v520
      %v561 = vadd.f32 %v481, %v529
      %v562 = vadd.f32 %v482, %v538
      %v563 = vadd.f32 %v483, %v547
      %v564 = vadd.f32 %v484, %v556
      %v565 = vadd.f32 %v446, 1.0
      %v566 = vadd.f32 %v448, 1.0
      %v567 = vadd.f32 %v450, 1.0
      %v568 = vadd.f32 %v452, 1.0
      %v569 = vadd.f32 %v454, 1.0
      %v570 = vadd.f32 %v456, 1.0
      %v571 = vadd.f32 %v458, 1.0
      %v572 = vadd.f32 %v460, 1.0
      %v573 = vrcp.pop %v565
      %v574 = vrcp.pop %v566
      %v575 = vrcp.pop %v567
      %v576 = vrcp.pop %v568
      %v577 = vrcp.pop %v569
      %v578 = vrcp.pop %v570
      %v579 = vrcp.pop %v571
      %v580 = vrcp.pop %v572
      %vm581 = vcmp.ge.f32.partialorder %v411, 0.0
      %vm582 = vcmp.ge.f32.partialorder %v412, 0.0
      %vm583 = vcmp.ge.f32.partialorder %v413, 0.0
      %vm584 = vcmp.ge.f32.partialorder %v414, 0.0
      %vm585 = vcmp.ge.f32.partialorder %v415, 0.0
      %vm586 = vcmp.ge.f32.partialorder %v416, 0.0
      %vm587 = vcmp.ge.f32.partialorder %v417, 0.0
      %vm588 = vcmp.ge.f32.partialorder %v418, 0.0
      %v589 = vmul.f32 %v446, %v573
      %v590 = vmul.f32 %v448, %v574
      %v591 = vmul.f32 %v450, %v575
      %v592 = vmul.f32 %v452, %v576
      %v593 = vmul.f32 %v454, %v577
      %v594 = vmul.f32 %v456, %v578
      %v595 = vmul.f32 %v458, %v579
      %v596 = vmul.f32 %v460, %v580
      %v597 = vsel %vm581, %v573, %v589
      %v598 = vsel %vm582, %v574, %v590
      %v599 = vsel %vm583, %v575, %v591
      %v600 = vsel %vm584, %v576, %v592
      %v601 = vsel %vm585, %v577, %v593
      %v602 = vsel %vm586, %v578, %v594
      %v603 = vsel %vm587, %v579, %v595
      %v604 = vsel %vm588, %v580, %v596
      %v605 = vmul.f32 %v421, -0.5
      %v606 = vmul.f32 %v422, -0.5
      %v607 = vmul.f32 %v423, -0.5
      %v608 = vmul.f32 %v424, -0.5
      %v609 = vmul.f32 %v425, -0.5
      %v610 = vmul.f32 %v426, -0.5
      %v611 = vmul.f32 %v427, -0.5
      %v612 = vmul.f32 %v428, -0.5
      %v613 = vadd.f32 %v605, 0.75
      %v614 = vadd.f32 %v606, 0.75
      %v615 = vadd.f32 %v607, 0.75
      %v616 = vadd.f32 %v608, 0.75
      %v617 = vadd.f32 %v609, 0.75
      %v618 = vadd.f32 %v610, 0.75
      %v619 = vadd.f32 %v611, 0.75
      %v620 = vadd.f32 %v612, 0.75
      %v621 = vsub.f32 %v421, %v597
      %v622 = vsub.f32 %v422, %v598
      %v623 = vsub.f32 %v423, %v599
      %v624 = vsub.f32 %v424, %v600
      %v625 = vsub.f32 %v425, %v601
      %v626 = vsub.f32 %v426, %v602
      %v627 = vsub.f32 %v427, %v603
      %v628 = vsub.f32 %v428, %v604
      %v629 = vand.u32 2147483647, %v621
      %v630 = vand.u32 2147483647, %v622
      %v631 = vand.u32 2147483647, %v623
      %v632 = vand.u32 2147483647, %v624
      %v633 = vand.u32 2147483647, %v625
      %v634 = vand.u32 2147483647, %v626
      %v635 = vand.u32 2147483647, %v627
      %v636 = vand.u32 2147483647, %v628
      %v637 = vrsqrt.pop %v629
      %v638 = vmul.f32 %v629, %v637
      %vm639 = vcmp.eq.f32.partialorder %v629, inf
      %v640 = vsel %vm639, %v629, %v638
      %vm641 = vcmp.eq.f32.partialorder %v629, 0.0
      %v642 = vand.u32 %v629, 2147483648
      %v643 = vsel %vm641, %v642, %v640
      %v644 = vrsqrt.pop %v630
      %v645 = vmul.f32 %v630, %v644
      %vm646 = vcmp.eq.f32.partialorder %v630, inf
      %v647 = vsel %vm646, %v630, %v645
      %vm648 = vcmp.eq.f32.partialorder %v630, 0.0
      %v649 = vand.u32 %v630, 2147483648
      %v650 = vsel %vm648, %v649, %v647
      %v651 = vrsqrt.pop %v631
      %v652 = vmul.f32 %v631, %v651
      %vm653 = vcmp.eq.f32.partialorder %v631, inf
      %v654 = vsel %vm653, %v631, %v652
      %vm655 = vcmp.eq.f32.partialorder %v631, 0.0
      %v656 = vand.u32 %v631, 2147483648
      %v657 = vsel %vm655, %v656, %v654
      %v658 = vrsqrt.pop %v632
      %v659 = vmul.f32 %v632, %v658
      %vm660 = vcmp.eq.f32.partialorder %v632, inf
      %v661 = vsel %vm660, %v632, %v659
      %vm662 = vcmp.eq.f32.partialorder %v632, 0.0
      %v663 = vand.u32 %v632, 2147483648
      %v664 = vsel %vm662, %v663, %v661
      %v665 = vrsqrt.pop %v633
      %v666 = vmul.f32 %v633, %v665
      %vm667 = vcmp.eq.f32.partialorder %v633, inf
      %v668 = vsel %vm667, %v633, %v666
      %vm669 = vcmp.eq.f32.partialorder %v633, 0.0
      %v670 = vand.u32 %v633, 2147483648
      %v671 = vsel %vm669, %v670, %v668
      %v672 = vrsqrt.pop %v634
      %v673 = vmul.f32 %v634, %v672
      %vm674 = vcmp.eq.f32.partialorder %v634, inf
      %v675 = vsel %vm674, %v634, %v673
      %vm676 = vcmp.eq.f32.partialorder %v634, 0.0
      %v677 = vand.u32 %v634, 2147483648
      %v678 = vsel %vm676, %v677, %v675
      %v679 = vrsqrt.pop %v635
      %v680 = vmul.f32 %v635, %v679
      %vm681 = vcmp.eq.f32.partialorder %v635, inf
      %v682 = vsel %vm681, %v635, %v680
      %vm683 = vcmp.eq.f32.partialorder %v635, 0.0
      %v684 = vand.u32 %v635, 2147483648
      %v685 = vsel %vm683, %v684, %v682
      %v686 = vrsqrt.pop %v636
      %v687 = vmul.f32 %v636, %v686
      %vm688 = vcmp.eq.f32.partialorder %v636, inf
      %v689 = vsel %vm688, %v636, %v687
      %vm690 = vcmp.eq.f32.partialorder %v636, 0.0
      %v691 = vand.u32 %v636, 2147483648
      %v692 = vsel %vm690, %v691, %v689
      %v693 = vmul.f32 %v629, %v643
      %v694 = vmul.f32 %v630, %v650
      %v695 = vmul.f32 %v631, %v657
      %v696 = vmul.f32 %v632, %v664
      %v697 = vmul.f32 %v633, %v671
      %v698 = vmul.f32 %v634, %v678
      %v699 = vmul.f32 %v635, %v685
      %v700 = vmul.f32 %v636, %v692
      %v701 = vmul.f32 %v557, %v613
      %v702 = vmul.f32 %v558, %v614
      %v703 = vmul.f32 %v559, %v615
      %v704 = vmul.f32 %v560, %v616
      %v705 = vmul.f32 %v561, %v617
      %v706 = vmul.f32 %v562, %v618
      %v707 = vmul.f32 %v563, %v619
      %v708 = vmul.f32 %v564, %v620
      %v709 = vmul.f32 %v701, %v693
      %v710 = vmul.f32 %v702, %v694
      %v711 = vmul.f32 %v703, %v695
      %v712 = vmul.f32 %v704, %v696
      %v713 = vmul.f32 %v705, %v697
      %v714 = vmul.f32 %v706, %v698
      %v715 = vmul.f32 %v707, %v699
      %v716 = vmul.f32 %v708, %v700
      %v717 = vlaneseq
      %v718 = vshrl.u32 %v717, 7
      %v719 = vlaneseq
      %v720 = vand.u32 %v719, 127
      %v721 = vadd.s32 %v720, 128
      %v722 = vadd.s32 %v720, 256
      %v723 = vadd.s32 %v720, 384
      %v724 = vadd.s32 %v720, 512
      %v725 = vadd.s32 %v720, 640
      %v726 = vadd.s32 %v720, 768
      %v727 = vadd.s32 %v720, 896
      %v728 = vmul.u32 %v718, 1024
      %v729 = vadd.s32 %v728, %v720
      %v730 = vadd.s32 %v728, %v721
      %v731 = vadd.s32 %v728, %v722
      %v732 = vadd.s32 %v728, %v723
      %v733 = vadd.s32 %v728, %v724
      %v734 = vadd.s32 %v728, %v725
      %v735 = vadd.s32 %v728, %v726
      %v736 = vadd.s32 %v728, %v727
      %v737 = vld [vmem:[#allocation7] sm:$0xff]
      %v738 = vld [vmem:[#allocation7 + $0x8] sm:$0xff]
      %v739 = vld [vmem:[#allocation7 + $0x10] sm:$0xff]
      %v740 = vld [vmem:[#allocation7 + $0x18] sm:$0xff]
      %v741 = vld [vmem:[#allocation7 + $0x20] sm:$0xff]
      %v742 = vld [vmem:[#allocation7 + $0x28] sm:$0xff]
      %v743 = vld [vmem:[#allocation7 + $0x30] sm:$0xff]
      %v744 = vld [vmem:[#allocation7 + $0x38] sm:$0xff]
      %vm745 = vcmp.lt.s32.totalorder %v729, 2048
      %vm746 = vcmp.lt.s32.totalorder %v730, 2048
      %vm747 = vcmp.lt.s32.totalorder %v731, 2048
      %vm748 = vcmp.lt.s32.totalorder %v732, 2048
      %vm749 = vcmp.lt.s32.totalorder %v733, 2048
      %vm750 = vcmp.lt.s32.totalorder %v734, 2048
      %vm751 = vcmp.lt.s32.totalorder %v735, 2048
      %vm752 = vcmp.lt.s32.totalorder %v736, 2048
      %v753 = vsel %vm745, %v709, 0.0
      %v754 = vsel %vm746, %v710, 0.0
      %v755 = vsel %vm747, %v711, 0.0
      %v756 = vsel %vm748, %v712, 0.0
      %v757 = vsel %vm749, %v713, 0.0
      %v758 = vsel %vm750, %v714, 0.0
      %v759 = vsel %vm751, %v715, 0.0
      %v760 = vsel %vm752, %v716, 0.0
      %v761 = vadd.f32 %v737, %v753
      %v762 = vadd.f32 %v738, %v754
      %v763 = vadd.f32 %v739, %v755
      %v764 = vadd.f32 %v740, %v756
      %v765 = vadd.f32 %v741, %v757
      %v766 = vadd.f32 %v742, %v758
      %v767 = vadd.f32 %v743, %v759
      %v768 = vadd.f32 %v744, %v760
      %769 = vst [vmem:[#allocation7] sm:$0xff] %v761
      %770 = vst [vmem:[#allocation7 + $0x8] sm:$0xff] %v762
      %771 = vst [vmem:[#allocation7 + $0x10] sm:$0xff] %v763
      %772 = vst [vmem:[#allocation7 + $0x18] sm:$0xff] %v764
      %773 = vst [vmem:[#allocation7 + $0x20] sm:$0xff] %v765
      %774 = vst [vmem:[#allocation7 + $0x28] sm:$0xff] %v766
      %775 = vst [vmem:[#allocation7 + $0x30] sm:$0xff] %v767
      %776 = vst [vmem:[#allocation7 + $0x38] sm:$0xff] %v768
    $region29: #{tpu_custom_call.1} parent=1 // pred_fallthru
      _
    // Predicated region
    $region30: #{tpu_custom_call.1} parent=1 // pred_check
      _
    $region31: #{tpu_custom_call.1} parent=1 // pred_check_branch
      %778 = sbr.rel (0) target = $region33
    $region32: #{tpu_custom_call.1} parent=1 // pred_region
      %s780 = ssub.s32 1024, 1024
      %781 = vsyncadd [#allocation4], %s780
      %s783 = sshll.u32 [#allocation7], 4
      %s784 = int_to_ptr.vmem [resolvable:$true] %s783
      %786 = dma.vmem_to_hbm [thread:$0]  %s784, 1024, %s2, [#allocation4]
    $region33: #{tpu_custom_call.1} parent=1 // pred_fallthru
      _
    // Predicated region
    $region34: #{tpu_custom_call.1} parent=1 // pred_check
      _
    $region35: #{tpu_custom_call.1} parent=1 // pred_check_branch
      %788 = sbr.rel (0) target = $region37
    $region36: #{tpu_custom_call.1} parent=1 // pred_region
      %789 = dma.done [#allocation4], 1024
    $region37: #{tpu_custom_call.1} parent=1 // pred_fallthru
      _
    %790 = vsyncpa [#allocation3], 1
    %791 = vsyncpa [#allocation6], 1
    %792 = vsyncpa [#allocation4], 1

</llo_original>
